<compile_context>
chip_gen: v7x
topology: tpu7x:2x2x1
jax: 0.10.0
libtpu: 0.0.40
codegen_flags: <defaults>
</compile_context>

<pallas_src>
import itertools

import numpy as np
import jax
import jax.numpy as jnp
from jax.experimental import pallas as pl
from jax.experimental.pallas import tpu as pltpu

BN_EPS = 1e-5


def _cdiv(a, b):
    return -(-a // b)


def _round_up(x, m):
    return _cdiv(x, m) * m


# ---------------------------------------------------------------------------
# Pass 1: sparse conv as ONE 128-deep MXU contraction per row tile
#         + per-tile BN partial statistics (single combined stats output).
# ---------------------------------------------------------------------------
def conv_stats_kernel(g_ref, w_ref, y_ref, stats_ref):
    """grid = (num_tiles,) over N row tiles (rows live on the lane axis).

    g_ref     : (Kc_pad, n_tile) bf16  gathered features, K*Cin folded+padded to 128
    w_ref     : (Cout, Kc_pad)   bf16  flattened weights (matching contraction order)
    y_ref     : (Cout, n_tile)   bf16  conv output tile (lane-dense store)
    stats_ref : (1, Cout, 2)     f32   per-tile [sum, sum-of-squares] over rows
    """
    y = jnp.dot(w_ref[...], g_ref[...], preferred_element_type=jnp.float32)
    y_ref[...] = y.astype(y_ref.dtype)
    s = jnp.sum(y, axis=1, keepdims=True)          # (Cout, 1)  f32 accumulator
    ss = jnp.sum(y * y, axis=1, keepdims=True)     # (Cout, 1)
    stats_ref[...] = jnp.concatenate([s, ss], axis=1)[None]


# ---------------------------------------------------------------------------
# Pass 2: apply BatchNorm (precomputed scale/shift) + ReLU and emit the final
#         (rows, Cout) layout directly (in-kernel transpose -> no wrapper .T).
# ---------------------------------------------------------------------------
def bn_relu_kernel(y_ref, scale_ref, shift_ref, o_ref):
    """y_ref: (Cout, n2) bf16 ; scale/shift: (Cout, 1) f32 ; o_ref: (n2, Cout) f32."""
    z = y_ref[...].astype(jnp.float32) * scale_ref[...] + shift_ref[...]
    o_ref[...] = jnp.transpose(jnp.maximum(z, 0.0), (1, 0))


def basic_convolution_block(feats, nbr, weight, gamma, beta, *,
                            max_tile=16384, max_tile_pass2=65536):
    """feats: (N, Cin) f32, nbr: (K, N) int32 (-1 = missing neighbor),
    weight: (K, Cin, Cout) f32, gamma/beta: (Cout,) f32.  Returns (N, Cout) f32."""
    N, Cin = feats.shape
    K, _, Cout = weight.shape
    Kc = K * Cin
    Kc_pad = _round_up(Kc, 128)

    # ---- pass-1 tiling: large tiles, >= 2 grid steps when possible (v7x 2 TC)
    n128 = _round_up(N, 128)
    t = _cdiv(n128, max_tile)
    if n128 >= 256:
        t = max(t, 2)
    n_tile = _round_up(_cdiv(n128, t), 128)
    N_pad = _round_up(n128, n_tile)
    num_tiles = N_pad // n_tile

    # ---- gather directly in (Kc, N) layout: N stays the lane axis ----------
    valid = nbr >= 0                                     # (K, N)
    idx = jnp.where(valid, nbr, 0)
    ft = feats.T                                         # (Cin, N) -- tiny
    g = jnp.where(valid[None, :, :], ft[:, idx], 0.0)    # (Cin, K, N)
    g_t = jnp.pad(g.reshape(Kc, N).astype(jnp.bfloat16),
                  ((0, Kc_pad - Kc), (0, N_pad - N)))    # (Kc_pad, N_pad) bf16

    # weight flattened in the matching (Cin-major, K-minor) order -- tiny op
    w_flat = jnp.transpose(weight, (1, 0, 2)).reshape(Kc, Cout)
    w_t = jnp.pad(w_flat, ((0, Kc_pad - Kc), (0, 0))).T.astype(jnp.bfloat16)  # (Cout, Kc_pad)

    # ---- pass 1: conv + per-tile partial BN stats ---------------------------
    y_bf, tile_stats = pl.pallas_call(
        conv_stats_kernel,
        out_shape=(
            jax.ShapeDtypeStruct((Cout, N_pad), jnp.bfloat16),
            jax.ShapeDtypeStruct((num_tiles, Cout, 2), jnp.float32),
        ),
        grid_spec=pltpu.PrefetchScalarGridSpec(
            num_scalar_prefetch=0,
            grid=(num_tiles,),
            in_specs=[
                pl.BlockSpec((Kc_pad, n_tile), lambda i: (0, i)),
                pl.BlockSpec((Cout, Kc_pad), lambda i: (0, 0)),
            ],
            out_specs=[
                pl.BlockSpec((Cout, n_tile), lambda i: (0, i)),
                pl.BlockSpec((1, Cout, 2), lambda i: (i, 0, 0)),
            ],
        ),
        compiler_params=pltpu.CompilerParams(
            dimension_semantics=("parallel",),
            vmem_limit_bytes=32 * 1024 * 1024),
    )(g_t, w_t)

    # ---- global BN statistics over the REAL rows only (tiny XLA op) --------
    # Zero-padded rows contribute 0 to the partial sums; divide by the real N.
    total = jnp.sum(tile_stats[:, :, 0], axis=0)                  # (Cout,)
    total_sq = jnp.sum(tile_stats[:, :, 1], axis=0)               # (Cout,)
    mean = total / N
    var = jnp.maximum(total_sq / N - mean * mean, 0.0)            # guarded 1-pass var
    scale = gamma * jax.lax.rsqrt(var + BN_EPS)
    shift = beta - mean * scale
    scale_t = scale.reshape(Cout, 1).astype(jnp.float32)
    shift_t = shift.reshape(Cout, 1).astype(jnp.float32)

    # ---- pass-2 tiling: independent, larger tiles ---------------------------
    k = max(1, min(max_tile_pass2 // n_tile, num_tiles))
    if num_tiles >= 2:
        k = min(k, max(1, num_tiles // 2))
    while num_tiles % k:
        k -= 1
    n2_tile = n_tile * k
    num_tiles2 = N_pad // n2_tile

    # ---- pass 2: apply BN + ReLU, emit (N_pad, Cout) directly ---------------
    out = pl.pallas_call(
        bn_relu_kernel,
        out_shape=jax.ShapeDtypeStruct((N_pad, Cout), jnp.float32),
        grid_spec=pltpu.PrefetchScalarGridSpec(
            num_scalar_prefetch=0,
            grid=(num_tiles2,),
            in_specs=[
                pl.BlockSpec((Cout, n2_tile), lambda i: (0, i)),
                pl.BlockSpec((Cout, 1), lambda i: (0, 0)),
                pl.BlockSpec((Cout, 1), lambda i: (0, 0)),
            ],
            out_specs=pl.BlockSpec((n2_tile, Cout), lambda i: (i, 0)),
        ),
        compiler_params=pltpu.CompilerParams(
            dimension_semantics=("parallel",),
            vmem_limit_bytes=32 * 1024 * 1024),
    )(y_bf, scale_t, shift_t)

    return out[:N]                                                # (N, Cout)


def build_kernel_map(coords_np, ks=3, dilation=1, D=3):
    """Host-side glue: for each of K = ks**D offsets and each output voxel,
    find the input voxel index at coord + offset (same batch), or -1."""
    # TODO(synk): coordinate hashing has no Pallas equivalent; stays on host.
    lut = {tuple(c): i for i, c in enumerate(coords_np.tolist())}
    half = (ks - 1) // 2
    offsets = list(itertools.product(range(-half, half + 1), repeat=D))
    K, N = len(offsets), coords_np.shape[0]
    nbr = np.full((K, N), -1, dtype=np.int32)
    for k, off in enumerate(offsets):
        for i, c in enumerate(coords_np):
            key = (c[0], c[1] + off[0] * dilation,
                   c[2] + off[1] * dilation, c[3] + off[2] * dilation)
            nbr[k, i] = lut.get(key, -1)
    return nbr


def reference(feats, nbr, weight, gamma, beta):
    """Pure-f32 reference matching the PyTorch module forward semantics
    (training-mode BN with biased batch variance)."""
    valid = (nbr >= 0)[..., None]
    g = jnp.where(valid, feats[jnp.clip(nbr, 0)], 0.0)            # (K, N, Cin)
    y = jnp.einsum("kni,kio->no", g, weight)
    mean = jnp.mean(y, axis=0, keepdims=True)
    var = jnp.mean((y - mean) ** 2, axis=0, keepdims=True)
    z = (y - mean) * jax.lax.rsqrt(var + BN_EPS) * gamma + beta
    return jnp.maximum(z, 0.0)


if __name__ == "__main__":
    # Small synthetic sparse tensor: batch=2, spatial 16^3, 64 active voxels
    # per batch item; inc=4, outc=8, ks=3, stride=1, dilation=1, D=3.
    inc, outc, ks, dilation, D = 4, 8, 3, 1, 3
    batch, spatial, vox_per_batch = 2, 16, 64

    key = jax.random.PRNGKey(0)
    k_coord, k_feat, k_w, k_g, k_b = jax.random.split(key, 5)

    # Deterministic unique active coordinates.
    cand = jax.random.randint(k_coord, (batch, 400, D), 0, spatial)
    coords_list = []
    for b in range(batch):
        uniq = np.unique(np.asarray(cand[b]), axis=0)[:vox_per_batch]
        bcol = np.full((uniq.shape[0], 1), b, dtype=np.int32)
        coords_list.append(np.concatenate([bcol, uniq.astype(np.int32)], axis=1))
    coords_np = np.concatenate(coords_list, axis=0)               # (N, 4)
    N = coords_np.shape[0]

    feats = jax.random.normal(k_feat, (N, inc), dtype=jnp.float32)

    # Deterministic parameter init (synthetic, not a checkpoint load).
    K = ks ** D
    weight = 0.1 * jax.random.normal(k_w, (K, inc, outc), dtype=jnp.float32)
    gamma = 1.0 + 0.1 * jax.random.normal(k_g, (outc,), dtype=jnp.float32)
    beta = 0.1 * jax.random.normal(k_b, (outc,), dtype=jnp.float32)

    # Kernel map (structural glue for the sparse convolution).
    nbr = jnp.asarray(build_kernel_map(coords_np, ks=ks, dilation=dilation, D=D))

    out = basic_convolution_block(feats, nbr, weight, gamma, beta)
    out = jax.block_until_ready(out)

    ref = reference(feats, nbr, weight, gamma, beta)
    # Tolerance accounts for the deliberate bf16 cast of the MXU inputs and of
    # the inter-pass y intermediate (accumulation and BN/ReLU math stay f32).
    np.testing.assert_allclose(np.asarray(out), np.asarray(ref),
                               rtol=5e-2, atol=5e-2)
    print("KERNEL_OK")
</pallas_src>

<mosaic_0001>
module attributes {stable_mosaic.version = 11 : i64} {
  func.func @conv_stats_kernel(%arg0: i32, %arg1: memref<128x128xbf16, #tpu.memory_space<vmem>>, %arg2: memref<8x128xbf16, #tpu.memory_space<vmem>>, %arg3: memref<8x128xbf16, #tpu.memory_space<vmem>>, %arg4: memref<1x8x2xf32, #tpu.memory_space<vmem>>) attributes {dimension_semantics = [#tpu.dimension_semantics<parallel>], iteration_bounds = array<i64: 1>, scalar_prefetch = 0 : i64, scratch_operands = 0 : i64, tpu.core_type = #tpu.core_type<tc>, window_params = [{transform_indices = @transform_0, window_bounds = array<i64: 128, 128>}, {pipeline_mode = #tpu.pipeline_mode<synchronous>, transform_indices = @transform_1, window_bounds = array<i64: 8, 128>}, {transform_indices = @transform_2, window_bounds = array<i64: 8, 128>}, {transform_indices = @transform_3, window_bounds = array<i64: 1, 8, 2>}]} {
    %c0 = arith.constant 0 : index
    %c0_0 = arith.constant 0 : index
    %0 = vector.load %arg2[%c0, %c0_0] : memref<8x128xbf16, #tpu.memory_space<vmem>>, vector<8x128xbf16>
    %c0_1 = arith.constant 0 : index
    %c0_2 = arith.constant 0 : index
    %1 = vector.load %arg1[%c0_1, %c0_2] : memref<128x128xbf16, #tpu.memory_space<vmem>>, vector<128x128xbf16>
    %cst = arith.constant dense<0.000000e+00> : vector<8x128xf32>
    %2 = tpu.matmul %0, %1, %cst {dimension_numbers = #tpu.dot_dimension_numbers<[1], [0], [0], [1], [0, 0, 1, 1], [], []>} : vector<8x128xbf16>, vector<128x128xbf16>, vector<8x128xf32> -> vector<8x128xf32>
    %3 = arith.truncf %2 : vector<8x128xf32> to vector<8x128xbf16>
    %c0_3 = arith.constant 0 : index
    %c0_4 = arith.constant 0 : index
    %4 = vector.load %arg3[%c0_3, %c0_4] : memref<8x128xbf16, #tpu.memory_space<vmem>>, vector<8x128xbf16>
    tpu.vector_store %arg3[%c0_3, %c0_4], %3 {strides = array<i32>} : memref<8x128xbf16, #tpu.memory_space<vmem>>, vector<8x128xbf16>,
    %cst_5 = arith.constant dense<0.000000e+00> : vector<8xf32>
    %5 = vector.multi_reduction <add>, %2, %cst_5 [1] : vector<8x128xf32> to vector<8xf32>
    %6 = vector.shape_cast %5 : vector<8xf32> to vector<8x1xf32>
    %7 = arith.mulf %2, %2 : vector<8x128xf32>
    %cst_6 = arith.constant dense<0.000000e+00> : vector<8xf32>
    %8 = vector.multi_reduction <add>, %7, %cst_6 [1] : vector<8x128xf32> to vector<8xf32>
    %9 = vector.shape_cast %8 : vector<8xf32> to vector<8x1xf32>
    %10 = tpu.concatenate %6, %9 in 1 : vector<8x1xf32>, vector<8x1xf32> -> vector<8x2xf32>
    %11 = vector.shape_cast %10 : vector<8x2xf32> to vector<1x8x2xf32>
    %c0_7 = arith.constant 0 : index
    %c0_8 = arith.constant 0 : index
    %c0_9 = arith.constant 0 : index
    %12 = vector.load %arg4[%c0_7, %c0_8, %c0_9] : memref<1x8x2xf32, #tpu.memory_space<vmem>>, vector<1x8x2xf32>
    tpu.vector_store %arg4[%c0_7, %c0_8, %c0_9], %11 {strides = array<i32>} : memref<1x8x2xf32, #tpu.memory_space<vmem>>, vector<1x8x2xf32>,
    return
  }
  func.func @transform_0(%arg0: i32) -> (i32, i32) {
    %c0_i32 = arith.constant 0 : i32
    %c0_i32_0 = arith.constant 0 : i32
    return %c0_i32, %arg0 : i32, i32
  }
  func.func @transform_1(%arg0: i32) -> (i32, i32) {
    %c0_i32 = arith.constant 0 : i32
    %c0_i32_0 = arith.constant 0 : i32
    %c0_i32_1 = arith.constant 0 : i32
    return %c0_i32, %c0_i32_0 : i32, i32
  }
  func.func @transform_2(%arg0: i32) -> (i32, i32) {
    %c0_i32 = arith.constant 0 : i32
    %c0_i32_0 = arith.constant 0 : i32
    return %c0_i32, %arg0 : i32, i32
  }
  func.func @transform_3(%arg0: i32) -> (i32, i32, i32) {
    %c0_i32 = arith.constant 0 : i32
    %c0_i32_0 = arith.constant 0 : i32
    %c0_i32_1 = arith.constant 0 : i32
    return %arg0, %c0_i32, %c0_i32_0 : i32, i32, i32
  }
}

</mosaic_0001>

<llo_original>
// kernel: tpu_custom_call.1
$region0: #{tpu_custom_call.1}
  #allocation0 [shape = 'u32[]', space=smem, size = 0x4, offset = 0x4, fixed_abs, tag = 'smem constant byte address 0x4 - core index']
  #allocation1 [shape = 'u32[144,128]{1,0:T(1,128)}', space=vmem, size = 0x12000, scoped, tag = 'internal scratch']
  %s0 = inlined_call_operand.hbm [shape: bf16[128,128], index: 0, kind: input, shape index: {}]
  %s1 = inlined_call_operand.hbm [shape: bf16[8,128], index: 1, kind: input, shape index: {}]
  %s2 = inlined_call_operand.hbm [shape: bf16[8,128], index: 2, kind: output, shape index: {0}]
  %s3 = inlined_call_operand.vmem [shape: f32[1,8,2], index: 3, kind: output, shape index: {1}]
  %4 = xla_tuple %s2, %s3
  %s5 = sld [smem:[#allocation0]]
  $region34: #{tpu_custom_call.1} parent=0
    _
  %s7 = ssub.s32 1, %s5
  %s8 = scalar_select 0, %s7, %s5
  $region1: #{tpu_custom_call.1} parent=0
    #allocation2 [shape = 'u8[32768]{0}', space=vmem, size = 0x8000, scoped, tag = 'input window, operand 0, single buffered']
    #allocation3 [shape = 's32[1]{0}', space=sflag, size = 0x4, scoped, tag = 'scoped memory for tpu_custom_call.1']
    #allocation4 [shape = 's32[1]{0}', space=sflag, size = 0x4, scoped, tag = 'scoped memory for tpu_custom_call.1']
    #allocation5 [shape = 'u8[2048]{0}', space=vmem, size = 0x800, scoped, tag = 'input window, operand 1, single buffered']
    #allocation6 [shape = 's32[1]{0}', space=sflag, size = 0x4, scoped, tag = 'scoped memory for tpu_custom_call.1']
    #allocation7 [shape = 'u8[2048]{0}', space=vmem, size = 0x800, scoped, tag = 'output window, operand 0, single buffered']
    %9 = vsyncpa [#allocation3], 0
    %10 = vsyncpa [#allocation6], 0
    %11 = vsyncpa [#allocation4], 0
    // Predicated region
    $region2: #{tpu_custom_call.1} parent=1 // pred_check
      _
    $region3: #{tpu_custom_call.1} parent=1 // pred_check_branch
      %13 = sbr.rel (0) target = $region5
    $region4: #{tpu_custom_call.1} parent=1 // pred_region
      %s15 = ssub.s32 1024, 1024
      %16 = vsyncadd [#allocation3], %s15
      %s17 = sshll.u32 [#allocation2], 4
      %s18 = int_to_ptr.vmem [resolvable:$true] %s17
      %23 = dma.hbm_to_vmem [thread:$0]  %s0, 1024, %s18, [#allocation3], 64, 64, 4
    $region5: #{tpu_custom_call.1} parent=1 // pred_fallthru
      _
    // Predicated region
    $region6: #{tpu_custom_call.1} parent=1 // pred_check
      _
    $region7: #{tpu_custom_call.1} parent=1 // pred_check_branch
      %25 = sbr.rel (0) target = $region9
    $region8: #{tpu_custom_call.1} parent=1 // pred_region
      %s27 = ssub.s32 64, 64
      %28 = vsyncadd [#allocation6], %s27
      %s30 = sshll.u32 [#allocation5], 4
      %s31 = int_to_ptr.vmem [resolvable:$true] %s30
      %33 = dma.hbm_to_vmem [thread:$0]  %s1, 64, %s31, [#allocation6]
    $region9: #{tpu_custom_call.1} parent=1 // pred_fallthru
      _
    // Predicated region
    $region10: #{tpu_custom_call.1} parent=1 // pred_check
      _
    $region11: #{tpu_custom_call.1} parent=1 // pred_check_branch
      %35 = sbr.rel (0) target = $region13
    $region12: #{tpu_custom_call.1} parent=1 // pred_region
      %36 = dma.done [#allocation3], 1024
    $region13: #{tpu_custom_call.1} parent=1 // pred_fallthru
      _
    // Predicated region
    $region14: #{tpu_custom_call.1} parent=1 // pred_check
      _
    $region15: #{tpu_custom_call.1} parent=1 // pred_check_branch
      %38 = sbr.rel (0) target = $region17
    $region16: #{tpu_custom_call.1} parent=1 // pred_region
      %39 = dma.done [#allocation6], 64
    $region17: #{tpu_custom_call.1} parent=1 // pred_fallthru
      _
    %v41 = vld [vmem:[#allocation5] sm:$0xf]
    %v42 = vld [vmem:[#allocation2] sm:$0xf]
    %v43 = vld [vmem:[#allocation2 + $0x4] sm:$0xf]
    %v44 = vld [vmem:[#allocation2 + $0x8] sm:$0xf]
    %v45 = vld [vmem:[#allocation2 + $0xc] sm:$0xf]
    %v46 = vld [vmem:[#allocation2 + $0x10] sm:$0xf]
    %v47 = vld [vmem:[#allocation2 + $0x14] sm:$0xf]
    %v48 = vld [vmem:[#allocation2 + $0x18] sm:$0xf]
    %v49 = vld [vmem:[#allocation2 + $0x1c] sm:$0xf]
    %v50 = vld [vmem:[#allocation2 + $0x20] sm:$0xf]
    %v51 = vld [vmem:[#allocation2 + $0x24] sm:$0xf]
    %v52 = vld [vmem:[#allocation2 + $0x28] sm:$0xf]
    %v53 = vld [vmem:[#allocation2 + $0x2c] sm:$0xf]
    %v54 = vld [vmem:[#allocation2 + $0x30] sm:$0xf]
    %v55 = vld [vmem:[#allocation2 + $0x34] sm:$0xf]
    %v56 = vld [vmem:[#allocation2 + $0x38] sm:$0xf]
    %v57 = vld [vmem:[#allocation2 + $0x3c] sm:$0xf]
    %v74 = vunpack.c.l.b16 %v42
    %v75 = vunpack.c.l.b16 %v43
    %v76 = vunpack.c.l.b16 %v44
    %v77 = vunpack.c.l.b16 %v45
    %v78 = vunpack.c.l.b16 %v46
    %v79 = vunpack.c.l.b16 %v47
    %v80 = vunpack.c.l.b16 %v48
    %v81 = vunpack.c.l.b16 %v49
    %v82 = vunpack.c.l.b16 %v50
    %v83 = vunpack.c.l.b16 %v51
    %v84 = vunpack.c.l.b16 %v52
    %v85 = vunpack.c.l.b16 %v53
    %v86 = vunpack.c.l.b16 %v54
    %v87 = vunpack.c.l.b16 %v55
    %v88 = vunpack.c.l.b16 %v56
    %v89 = vunpack.c.l.b16 %v57
    %v90 = vpack.c.b16 %v75, %v74
    %v91 = vpack.c.b16 %v77, %v76
    %v92 = vpack.c.b16 %v79, %v78
    %v93 = vpack.c.b16 %v81, %v80
    %v94 = vpack.c.b16 %v83, %v82
    %v95 = vpack.c.b16 %v85, %v84
    %v96 = vpack.c.b16 %v87, %v86
    %v97 = vpack.c.b16 %v89, %v88
    %106 = vmatprep.subr.bf16.mxu0 0
    %107 = vmatpush1.bf16.msra.mxu0 %v90
    %108 = vmatprep.subr.bf16.mxu0 0
    %109 = vmatpush1.bf16.msra.mxu0 %v91
    %110 = vmatprep.subr.bf16.mxu0 0
    %111 = vmatpush1.bf16.msra.mxu0 %v92
    %112 = vmatprep.subr.bf16.mxu0 0
    %113 = vmatpush1.bf16.msra.mxu0 %v93
    %114 = vmatprep.subr.bf16.mxu0 0
    %115 = vmatpush1.bf16.msra.mxu0 %v94
    %116 = vmatprep.subr.bf16.mxu0 0
    %117 = vmatpush1.bf16.msra.mxu0 %v95
    %118 = vmatprep.subr.bf16.mxu0 0
    %119 = vmatpush1.bf16.msra.mxu0 %v96
    %120 = vmatprep.subr.bf16.mxu0 0
    %121 = vmatpush1.bf16.msra.mxu0 %v97
    %122 = vmatprep.subr.bf16.mxu0 0
    %123 = vmatpush1.bf16.msra.mxu0 0
    %124 = vmatprep.subr.bf16.mxu0 0
    %125 = vmatpush1.bf16.msra.mxu0 0
    %126 = vmatprep.subr.bf16.mxu0 0
    %127 = vmatpush1.bf16.msra.mxu0 0
    %128 = vmatprep.subr.bf16.mxu0 0
    %129 = vmatpush1.bf16.msra.mxu0 0
    %130 = vmatprep.subr.bf16.mxu0 0
    %131 = vmatpush1.bf16.msra.mxu0 0
    %132 = vmatprep.subr.bf16.mxu0 0
    %133 = vmatpush1.bf16.msra.mxu0 0
    %134 = vmatprep.subr.bf16.mxu0 0
    %135 = vmatpush1.bf16.msra.mxu0 0
    %136 = vmatprep.subr.bf16.mxu0 0
    %137 = vmatpush1.bf16.msra.mxu0 0
    %138 = vmatprep.mubr.bf16.mxu0 0
    %139 = vmatmul.mubr.bf16.gmra.mrb[0].mxu0 %v41
    %v140 = vpop.f32.mrb[0].mxu0
    %v141 = vadd.f32 0.0, %v140
    %v142 = vpop.f32.mrb[0].mxu0
    %v143 = vpop.f32.mrb[0].mxu0
    %v144 = vpop.f32.mrb[0].mxu0
    %145 = vdwg.mxu0
    %v146 = vpack.c.bf16 %v141, %v141
    %147 = vst [vmem:[#allocation7] sm:$0xf] %v146
    %148 = vadd.xlane.f32.xlu0 %v141
    %v149 = vpop.xlane.xlu0 %148
    %v150 = vmul.f32 %v141, %v141
    %151 = vadd.xlane.f32.xlu0 %v150
    %v152 = vpop.xlane.xlu0 %151
    %vm153 = vcmask 7168
    %v154 = vsel %vm153, %v149, %v152
    %vm155 = vcmask 15360
    %156 = vst.msk [vmem:[%s3] sm:$0xff] %vm155, %v154
    // Predicated region
    $region18: #{tpu_custom_call.1} parent=1 // pred_check
      _
    $region19: #{tpu_custom_call.1} parent=1 // pred_check_branch
      %158 = sbr.rel (0) target = $region21
    $region20: #{tpu_custom_call.1} parent=1 // pred_region
      %s160 = ssub.s32 64, 64
      %161 = vsyncadd [#allocation4], %s160
      %s163 = sshll.u32 [#allocation7], 4
      %s164 = int_to_ptr.vmem [resolvable:$true] %s163
      %166 = dma.vmem_to_hbm [thread:$0]  %s164, 64, %s2, [#allocation4]
    $region21: #{tpu_custom_call.1} parent=1 // pred_fallthru
      _
    // Predicated region
    $region22: #{tpu_custom_call.1} parent=1 // pred_check
      _
    $region23: #{tpu_custom_call.1} parent=1 // pred_check_branch
      %168 = sbr.rel (0) target = $region25
    $region24: #{tpu_custom_call.1} parent=1 // pred_region
      _
    $region25: #{tpu_custom_call.1} parent=1 // pred_fallthru
      _
    // Predicated region
    $region26: #{tpu_custom_call.1} parent=1 // pred_check
      _
    $region27: #{tpu_custom_call.1} parent=1 // pred_check_branch
      %170 = sbr.rel (0) target = $region29
    $region28: #{tpu_custom_call.1} parent=1 // pred_region
      %171 = dma.done [#allocation4], 64
    $region29: #{tpu_custom_call.1} parent=1 // pred_fallthru
      _
    // Predicated region
    $region30: #{tpu_custom_call.1} parent=1 // pred_check
      _
    $region31: #{tpu_custom_call.1} parent=1 // pred_check_branch
      %173 = sbr.rel (0) target = $region33
    $region32: #{tpu_custom_call.1} parent=1 // pred_region
      _
    $region33: #{tpu_custom_call.1} parent=1 // pred_fallthru
      _
    %174 = vsyncpa [#allocation3], 1
    %175 = vsyncpa [#allocation6], 1
    %176 = vsyncpa [#allocation4], 1

</llo_original>
